<compile_context>
chip_gen: v7x
topology: tpu7x:2x2x1
jax: 0.10.0
libtpu: 0.0.40
codegen_flags: <defaults>
</compile_context>

<pallas_src>
import jax
import jax.numpy as jnp
from jax.experimental import pallas as pl
from jax.experimental.pallas import tpu as pltpu


def _round_up(x, m):
    return (x + m - 1) // m * m


def _pick_block_rows(M):
    """Row-tile heuristic: large tiles (<=2048), small padding waste, and
    >=2 grid steps when M allows it (so v7x's two TensorCores both get work)."""
    M8 = _round_up(M, 8)
    for br in (2048, 1024, 512, 256, 128, 64, 32, 16, 8):
        Mp = _round_up(M, br)
        if (Mp - M) <= max(32, M // 32) and (Mp // br) >= 2:
            return br, Mp
    # Tiny inputs: a single whole-M block (rounded to the 8-sublane grain).
    return M8, M8


def _wsfnn_kernel(x_ref, w1_ref, b1_ref, w2_ref, b2_ref, w3_ref, b3_ref,
                  frame_ref):
    # x_ref block: (block_rows, F) float32.
    x = x_ref[...]

    h1 = jnp.dot(x, w1_ref[...], preferred_element_type=jnp.float32) + b1_ref[...]
    h1 = jnp.maximum(h1, 0.0)

    h2 = jnp.dot(h1, w2_ref[...], preferred_element_type=jnp.float32) + b2_ref[...]
    h2 = jnp.maximum(h2, 0.0)

    logits = jnp.dot(h2, w3_ref[...], preferred_element_type=jnp.float32) + b3_ref[...]

    # sigmoid = 1 / (1 + exp(-z)); exp lands on the EUP.  Exact reciprocal
    # (approx=False) keeps 1e-5 parity with the f32 reference.
    frame_ref[...] = pl.reciprocal(1.0 + jnp.exp(-logits), approx=False)


@jax.jit
def sed_model_forward(x, w1, b1, w2, b2, w3, b3):
    B, T, F = x.shape
    H1, H2, C = w1.shape[1], w2.shape[1], w3.shape[1]

    # Flatten (B, T) -> M rows; adaptive row tiling (see _pick_block_rows).
    M = B * T
    block_rows, Mp = _pick_block_rows(M)

    x2 = x.reshape(M, F)
    if Mp != M:
        x2 = jnp.pad(x2, ((0, Mp - M), (0, 0)))

    grid = (Mp // block_rows,)

    flops = 2 * Mp * (F * H1 + H1 * H2 + H2 * C)
    transcendentals = Mp * C
    bytes_accessed = 4 * (Mp * F + Mp * C
                          + F * H1 + H1 * H2 + H2 * C
                          + H1 + H2 + C)

    frame_flat = pl.pallas_call(
        _wsfnn_kernel,
        out_shape=jax.ShapeDtypeStruct((Mp, C), jnp.float32),
        grid_spec=pltpu.PrefetchScalarGridSpec(
            num_scalar_prefetch=0,
            grid=grid,
            in_specs=[
                pl.BlockSpec((block_rows, F), lambda i: (i, 0)),  # x rows
                pl.BlockSpec((F, H1), lambda i: (0, 0)),          # W1 (resident)
                pl.BlockSpec((1, H1), lambda i: (0, 0)),          # b1
                pl.BlockSpec((H1, H2), lambda i: (0, 0)),         # W2
                pl.BlockSpec((1, H2), lambda i: (0, 0)),          # b2
                pl.BlockSpec((H2, C), lambda i: (0, 0)),          # W3 (unpadded C)
                pl.BlockSpec((1, C), lambda i: (0, 0)),           # b3
            ],
            out_specs=pl.BlockSpec((block_rows, C), lambda i: (i, 0)),
        ),
        compiler_params=pltpu.CompilerParams(
            dimension_semantics=("parallel",)),
        cost_estimate=pl.CostEstimate(
            flops=flops,
            transcendentals=transcendentals,
            bytes_accessed=bytes_accessed),
    )(x2, w1, b1, w2, b2, w3, b3)

    if Mp != M:                       # small C-wide row slice; rare & cheap
        frame_flat = frame_flat[:M]
    frame_prob = frame_flat.reshape(B, T, C)   # metadata-only when Mp == M
    clip_prob = jnp.mean(frame_prob, axis=1)   # tiny reduction; plain XLA
    return frame_prob, clip_prob


def init_params(key, n_mels=64, hidden1=32, hidden2=32, class_num=10):
    """Deterministic PyTorch-style (uniform +-1/sqrt(fan_in)) init."""
    def linear(k, fan_in, fan_out):
        kw, kb = jax.random.split(k)
        bound = 1.0 / jnp.sqrt(fan_in)
        w = jax.random.uniform(kw, (fan_in, fan_out), jnp.float32, -bound, bound)
        b = jax.random.uniform(kb, (1, fan_out), jnp.float32, -bound, bound)
        return w, b

    k1, k2, k3 = jax.random.split(key, 3)
    w1, b1 = linear(k1, n_mels, hidden1)
    w2, b2 = linear(k2, hidden1, hidden2)
    w3, b3 = linear(k3, hidden2, class_num)
    return w1, b1, w2, b2, w3, b3


def _reference_forward(x, w1, b1, w2, b2, w3, b3):
    h1 = jnp.maximum(jnp.einsum('btf,fh->bth', x, w1) + b1, 0.0)
    h2 = jnp.maximum(jnp.einsum('bth,hk->btk', h1, w2) + b2, 0.0)
    frame = jax.nn.sigmoid(jnp.einsum('btk,kc->btc', h2, w3) + b3)
    return frame, frame.mean(axis=1)


if __name__ == "__main__":
    B, T, F = 2, 16, 64      # batch, time frames, mel bins
    CLASS_NUM = 10

    key = jax.random.PRNGKey(0)
    kx, kp = jax.random.split(key)
    x = jax.random.normal(kx, (B, T, F), dtype=jnp.float32)
    params = init_params(kp, n_mels=F, hidden1=32, hidden2=32,
                         class_num=CLASS_NUM)

    frame_prob, clip_prob = sed_model_forward(x, *params)
    jax.block_until_ready((frame_prob, clip_prob))

    assert frame_prob.shape == (B, T, CLASS_NUM)
    assert clip_prob.shape == (B, CLASS_NUM)

    ref_frame, ref_clip = _reference_forward(x, *params)
    assert jnp.allclose(frame_prob, ref_frame, atol=1e-5, rtol=1e-5)
    assert jnp.allclose(clip_prob, ref_clip, atol=1e-5, rtol=1e-5)

    print("KERNEL_OK")
</pallas_src>

<mosaic_0001>
module attributes {stable_mosaic.version = 11 : i64} {
  func.func @_wsfnn_kernel(%arg0: i32, %arg1: memref<16x64xf32, #tpu.memory_space<vmem>>, %arg2: memref<64x32xf32, #tpu.memory_space<vmem>>, %arg3: memref<1x32xf32, #tpu.memory_space<vmem>>, %arg4: memref<32x32xf32, #tpu.memory_space<vmem>>, %arg5: memref<1x32xf32, #tpu.memory_space<vmem>>, %arg6: memref<32x10xf32, #tpu.memory_space<vmem>>, %arg7: memref<1x10xf32, #tpu.memory_space<vmem>>, %arg8: memref<16x10xf32, #tpu.memory_space<vmem>>) attributes {dimension_semantics = [#tpu.dimension_semantics<parallel>], iteration_bounds = array<i64: 2>, scalar_prefetch = 0 : i64, scratch_operands = 0 : i64, tpu.core_type = #tpu.core_type<tc>, window_params = [{transform_indices = @transform_0, window_bounds = array<i64: 16, 64>}, {pipeline_mode = #tpu.pipeline_mode<synchronous>, transform_indices = @transform_1, window_bounds = array<i64: 64, 32>}, {pipeline_mode = #tpu.pipeline_mode<synchronous>, transform_indices = @transform_2, window_bounds = array<i64: 1, 32>}, {pipeline_mode = #tpu.pipeline_mode<synchronous>, transform_indices = @transform_3, window_bounds = array<i64: 32, 32>}, {pipeline_mode = #tpu.pipeline_mode<synchronous>, transform_indices = @transform_4, window_bounds = array<i64: 1, 32>}, {pipeline_mode = #tpu.pipeline_mode<synchronous>, transform_indices = @transform_5, window_bounds = array<i64: 32, 10>}, {pipeline_mode = #tpu.pipeline_mode<synchronous>, transform_indices = @transform_6, window_bounds = array<i64: 1, 10>}, {transform_indices = @transform_7, window_bounds = array<i64: 16, 10>}]} {
    %c0 = arith.constant 0 : index
    %c0_0 = arith.constant 0 : index
    %0 = vector.load %arg1[%c0, %c0_0] : memref<16x64xf32, #tpu.memory_space<vmem>>, vector<16x64xf32>
    %c0_1 = arith.constant 0 : index
    %c0_2 = arith.constant 0 : index
    %1 = vector.load %arg2[%c0_1, %c0_2] : memref<64x32xf32, #tpu.memory_space<vmem>>, vector<64x32xf32>
    %cst = arith.constant dense<0.000000e+00> : vector<16x32xf32>
    %2 = tpu.matmul %0, %1, %cst {dimension_numbers = #tpu.dot_dimension_numbers<[1], [0], [0], [1], [0, 0, 1, 1], [], []>} : vector<16x64xf32>, vector<64x32xf32>, vector<16x32xf32> -> vector<16x32xf32>
    %c0_3 = arith.constant 0 : index
    %c0_4 = arith.constant 0 : index
    %3 = vector.load %arg3[%c0_3, %c0_4] : memref<1x32xf32, #tpu.memory_space<vmem>>, vector<1x32xf32>
    %4 = vector.broadcast %3 : vector<1x32xf32> to vector<16x32xf32>
    %5 = arith.addf %2, %4 : vector<16x32xf32>
    %cst_5 = arith.constant 0.000000e+00 : f32
    %6 = vector.broadcast %cst_5 : f32 to vector<16x32xf32>
    %7 = arith.maximumf %5, %6 : vector<16x32xf32>
    %c0_6 = arith.constant 0 : index
    %c0_7 = arith.constant 0 : index
    %8 = vector.load %arg4[%c0_6, %c0_7] : memref<32x32xf32, #tpu.memory_space<vmem>>, vector<32x32xf32>
    %cst_8 = arith.constant dense<0.000000e+00> : vector<16x32xf32>
    %9 = tpu.matmul %7, %8, %cst_8 {dimension_numbers = #tpu.dot_dimension_numbers<[1], [0], [0], [1], [0, 0, 1, 1], [], []>} : vector<16x32xf32>, vector<32x32xf32>, vector<16x32xf32> -> vector<16x32xf32>
    %c0_9 = arith.constant 0 : index
    %c0_10 = arith.constant 0 : index
    %10 = vector.load %arg5[%c0_9, %c0_10] : memref<1x32xf32, #tpu.memory_space<vmem>>, vector<1x32xf32>
    %11 = vector.broadcast %10 : vector<1x32xf32> to vector<16x32xf32>
    %12 = arith.addf %9, %11 : vector<16x32xf32>
    %cst_11 = arith.constant 0.000000e+00 : f32
    %13 = vector.broadcast %cst_11 : f32 to vector<16x32xf32>
    %14 = arith.maximumf %12, %13 : vector<16x32xf32>
    %c0_12 = arith.constant 0 : index
    %c0_13 = arith.constant 0 : index
    %15 = vector.load %arg6[%c0_12, %c0_13] : memref<32x10xf32, #tpu.memory_space<vmem>>, vector<32x10xf32>
    %cst_14 = arith.constant dense<0.000000e+00> : vector<16x10xf32>
    %16 = tpu.matmul %14, %15, %cst_14 {dimension_numbers = #tpu.dot_dimension_numbers<[1], [0], [0], [1], [0, 0, 1, 1], [], []>} : vector<16x32xf32>, vector<32x10xf32>, vector<16x10xf32> -> vector<16x10xf32>
    %c0_15 = arith.constant 0 : index
    %c0_16 = arith.constant 0 : index
    %17 = vector.load %arg7[%c0_15, %c0_16] : memref<1x10xf32, #tpu.memory_space<vmem>>, vector<1x10xf32>
    %18 = vector.broadcast %17 : vector<1x10xf32> to vector<16x10xf32>
    %19 = arith.addf %16, %18 : vector<16x10xf32>
    %cst_17 = arith.constant 0.000000e+00 : f32
    %20 = vector.broadcast %cst_17 : f32 to vector<16x10xf32>
    %21 = arith.subf %20, %19 : vector<16x10xf32>
    %22 = math.exp %21 : vector<16x10xf32>
    %cst_18 = arith.constant 1.000000e+00 : f32
    %23 = vector.broadcast %cst_18 : f32 to vector<16x10xf32>
    %24 = arith.addf %23, %22 : vector<16x10xf32>
    %25 = tpu.reciprocal %24 : vector<16x10xf32> -> vector<16x10xf32>
    %c0_19 = arith.constant 0 : index
    %c0_20 = arith.constant 0 : index
    %26 = vector.load %arg8[%c0_19, %c0_20] : memref<16x10xf32, #tpu.memory_space<vmem>>, vector<16x10xf32>
    tpu.vector_store %arg8[%c0_19, %c0_20], %25 {strides = array<i32>} : memref<16x10xf32, #tpu.memory_space<vmem>>, vector<16x10xf32>,
    return
  }
  func.func @transform_0(%arg0: i32) -> (i32, i32) {
    %c0_i32 = arith.constant 0 : i32
    %c0_i32_0 = arith.constant 0 : i32
    return %arg0, %c0_i32 : i32, i32
  }
  func.func @transform_1(%arg0: i32) -> (i32, i32) {
    %c0_i32 = arith.constant 0 : i32
    %c0_i32_0 = arith.constant 0 : i32
    %c0_i32_1 = arith.constant 0 : i32
    return %c0_i32, %c0_i32_0 : i32, i32
  }
  func.func @transform_2(%arg0: i32) -> (i32, i32) {
    %c0_i32 = arith.constant 0 : i32
    %c0_i32_0 = arith.constant 0 : i32
    %c0_i32_1 = arith.constant 0 : i32
    return %c0_i32, %c0_i32_0 : i32, i32
  }
  func.func @transform_3(%arg0: i32) -> (i32, i32) {
    %c0_i32 = arith.constant 0 : i32
    %c0_i32_0 = arith.constant 0 : i32
    %c0_i32_1 = arith.constant 0 : i32
    return %c0_i32, %c0_i32_0 : i32, i32
  }
  func.func @transform_4(%arg0: i32) -> (i32, i32) {
    %c0_i32 = arith.constant 0 : i32
    %c0_i32_0 = arith.constant 0 : i32
    %c0_i32_1 = arith.constant 0 : i32
    return %c0_i32, %c0_i32_0 : i32, i32
  }
  func.func @transform_5(%arg0: i32) -> (i32, i32) {
    %c0_i32 = arith.constant 0 : i32
    %c0_i32_0 = arith.constant 0 : i32
    %c0_i32_1 = arith.constant 0 : i32
    return %c0_i32, %c0_i32_0 : i32, i32
  }
  func.func @transform_6(%arg0: i32) -> (i32, i32) {
    %c0_i32 = arith.constant 0 : i32
    %c0_i32_0 = arith.constant 0 : i32
    %c0_i32_1 = arith.constant 0 : i32
    return %c0_i32, %c0_i32_0 : i32, i32
  }
  func.func @transform_7(%arg0: i32) -> (i32, i32) {
    %c0_i32 = arith.constant 0 : i32
    %c0_i32_0 = arith.constant 0 : i32
    return %arg0, %c0_i32 : i32, i32
  }
}

</mosaic_0001>

<llo_original>
// kernel: sed_model_forward.1
$region0: #{sed_model_forward.1}
  #allocation0 [shape = 'u32[]', space=smem, size = 0x4, offset = 0x4, fixed_abs, tag = 'smem constant byte address 0x4 - core index']
  #allocation1 [shape = 'u32[144,128]{1,0:T(1,128)}', space=vmem, size = 0x12000, scoped, tag = 'internal scratch']
  %s0 = inlined_call_operand.vmem [shape: f32[32,64], index: 0, kind: input, shape index: {}]
  %s1 = inlined_call_operand.vmem [shape: f32[64,32], index: 1, kind: input, shape index: {}]
  %s2 = inlined_call_operand.vmem [shape: f32[1,32], index: 2, kind: input, shape index: {}]
  %s3 = inlined_call_operand.vmem [shape: f32[32,32], index: 3, kind: input, shape index: {}]
  %s4 = inlined_call_operand.vmem [shape: f32[1,32], index: 4, kind: input, shape index: {}]
  %s5 = inlined_call_operand.vmem [shape: f32[32,10], index: 5, kind: input, shape index: {}]
  %s6 = inlined_call_operand.vmem [shape: f32[1,10], index: 6, kind: input, shape index: {}]
  %s7 = inlined_call_operand.vmem [shape: f32[32,10], index: 7, kind: output, shape index: {}]
  %s8 = sld [smem:[#allocation0]]
  $region61: #{sed_model_forward.1} parent=0
    _
  %s10 = ssub.s32 1, %s8
  %s11 = scalar_select 0, %s10, %s8
  loop: start=0, step=1, limit=4
  $region2: #{sed_model_forward.1} parent=0 // loop_pre_header
    _
  $region3: #{sed_model_forward.1} parent=0 // loop_header
    %s13 = sphi 0, %s17
    %p14 = scmp.ge.s32.totalorder %s13, 4
    %s23 = sphi 0, %s25
    %s26 = sphi 0, %s23
    %s27 = sphi 0, %s26
    %s43 = sphi 0, %s27
    %s47 = sphi 0, %s47
    %s49 = sphi 0, %s47
    %s50 = sphi 0, %s49
    %s64 = sphi 0, %s50
    %s68 = sphi 0, %s68
    %s70 = sphi 0, %s68
    %s71 = sphi 0, %s70
    %s85 = sphi 0, %s71
    %s89 = sphi 0, %s89
    %s91 = sphi 0, %s89
    %s92 = sphi 0, %s91
    %s106 = sphi 0, %s92
    %s110 = sphi 0, %s110
    %s112 = sphi 0, %s110
    %s113 = sphi 0, %s112
    %s127 = sphi 0, %s113
    %s131 = sphi 0, %s131
    %s133 = sphi 0, %s131
    %s134 = sphi 0, %s133
    %s148 = sphi 0, %s134
    %s152 = sphi 0, %s152
    %s154 = sphi 0, %s152
    %s155 = sphi 0, %s154
    %s169 = sphi 0, %s155
    %s175 = sphi 0, %s177
    %s178 = sphi 0, %s175
    %s179 = sphi 0, %s178
    %s195 = sphi 0, %s179
  $region4: #{sed_model_forward.1} parent=0 // loop_header_branch
    %16 = sbr.rel (%p14) target = $region8
  $region5: #{sed_model_forward.1} parent=0 // loop_body
    %s18 = ssub.s32 %s13, 1
    %s19 = ssub.s32 %s13, 2
    %s20 = sadd.s32 %s13, 1
    %s21 = ssub.s32 %s13, %s20
    %p22 = scmp.eq.s32.totalorder %s21, 0
    %s24 = sadd.s32 %s23, 1
    %s25 = scalar_select %p22, %s23, %s24
    %p28 = pneg %p22
    %p29 = scmp.eq.s32.totalorder %s13, 1
    %p30 = por %p28, %p29
    %p31 = scmp.ne.s32.totalorder %s23, %s26
    %p32 = scmp.eq.s32.totalorder %s13, 0
    %p33 = por %p31, %p32
    %p34 = scmp.ne.s32.totalorder %s23, %s26
    %p35 = scmp.eq.s32.totalorder %s18, 1
    %p36 = por %p34, %p35
    %p37 = scmp.ne.s32.totalorder %s26, %s27
    %p38 = scmp.eq.s32.totalorder %s18, 0
    %p39 = por %p37, %p38
    %p40 = scmp.ne.s32.totalorder %s26, %s27
    %p41 = scmp.eq.s32.totalorder %s19, 1
    %p42 = por %p40, %p41
    %p44 = scmp.ne.s32.totalorder %s27, %s43
    %p45 = scmp.eq.s32.totalorder %s19, 0
    %p46 = por %p44, %p45
    %s48 = sadd.s32 %s47, 1
    %p51 = scmp.eq.s32.totalorder %s13, 1
    %p52 = scmp.ne.s32.totalorder %s47, %s49
    %p53 = scmp.eq.s32.totalorder %s13, 0
    %p54 = por %p52, %p53
    %p55 = scmp.ne.s32.totalorder %s47, %s49
    %p56 = scmp.eq.s32.totalorder %s18, 1
    %p57 = por %p55, %p56
    %p58 = scmp.ne.s32.totalorder %s49, %s50
    %p59 = scmp.eq.s32.totalorder %s18, 0
    %p60 = por %p58, %p59
    %p61 = scmp.ne.s32.totalorder %s49, %s50
    %p62 = scmp.eq.s32.totalorder %s19, 1
    %p63 = por %p61, %p62
    %p65 = scmp.ne.s32.totalorder %s50, %s64
    %p66 = scmp.eq.s32.totalorder %s19, 0
    %p67 = por %p65, %p66
    %s69 = sadd.s32 %s68, 1
    %p72 = scmp.eq.s32.totalorder %s13, 1
    %p73 = scmp.ne.s32.totalorder %s68, %s70
    %p74 = scmp.eq.s32.totalorder %s13, 0
    %p75 = por %p73, %p74
    %p76 = scmp.ne.s32.totalorder %s68, %s70
    %p77 = scmp.eq.s32.totalorder %s18, 1
    %p78 = por %p76, %p77
    %p79 = scmp.ne.s32.totalorder %s70, %s71
    %p80 = scmp.eq.s32.totalorder %s18, 0
    %p81 = por %p79, %p80
    %p82 = scmp.ne.s32.totalorder %s70, %s71
    %p83 = scmp.eq.s32.totalorder %s19, 1
    %p84 = por %p82, %p83
    %p86 = scmp.ne.s32.totalorder %s71, %s85
    %p87 = scmp.eq.s32.totalorder %s19, 0
    %p88 = por %p86, %p87
    %s90 = sadd.s32 %s89, 1
    %p93 = scmp.eq.s32.totalorder %s13, 1
    %p94 = scmp.ne.s32.totalorder %s89, %s91
    %p95 = scmp.eq.s32.totalorder %s13, 0
    %p96 = por %p94, %p95
    %p97 = scmp.ne.s32.totalorder %s89, %s91
    %p98 = scmp.eq.s32.totalorder %s18, 1
    %p99 = por %p97, %p98
    %p100 = scmp.ne.s32.totalorder %s91, %s92
    %p101 = scmp.eq.s32.totalorder %s18, 0
    %p102 = por %p100, %p101
    %p103 = scmp.ne.s32.totalorder %s91, %s92
    %p104 = scmp.eq.s32.totalorder %s19, 1
    %p105 = por %p103, %p104
    %p107 = scmp.ne.s32.totalorder %s92, %s106
    %p108 = scmp.eq.s32.totalorder %s19, 0
    %p109 = por %p107, %p108
    %s111 = sadd.s32 %s110, 1
    %p114 = scmp.eq.s32.totalorder %s13, 1
    %p115 = scmp.ne.s32.totalorder %s110, %s112
    %p116 = scmp.eq.s32.totalorder %s13, 0
    %p117 = por %p115, %p116
    %p118 = scmp.ne.s32.totalorder %s110, %s112
    %p119 = scmp.eq.s32.totalorder %s18, 1
    %p120 = por %p118, %p119
    %p121 = scmp.ne.s32.totalorder %s112, %s113
    %p122 = scmp.eq.s32.totalorder %s18, 0
    %p123 = por %p121, %p122
    %p124 = scmp.ne.s32.totalorder %s112, %s113
    %p125 = scmp.eq.s32.totalorder %s19, 1
    %p126 = por %p124, %p125
    %p128 = scmp.ne.s32.totalorder %s113, %s127
    %p129 = scmp.eq.s32.totalorder %s19, 0
    %p130 = por %p128, %p129
    %s132 = sadd.s32 %s131, 1
    %p135 = scmp.eq.s32.totalorder %s13, 1
    %p136 = scmp.ne.s32.totalorder %s131, %s133
    %p137 = scmp.eq.s32.totalorder %s13, 0
    %p138 = por %p136, %p137
    %p139 = scmp.ne.s32.totalorder %s131, %s133
    %p140 = scmp.eq.s32.totalorder %s18, 1
    %p141 = por %p139, %p140
    %p142 = scmp.ne.s32.totalorder %s133, %s134
    %p143 = scmp.eq.s32.totalorder %s18, 0
    %p144 = por %p142, %p143
    %p145 = scmp.ne.s32.totalorder %s133, %s134
    %p146 = scmp.eq.s32.totalorder %s19, 1
    %p147 = por %p145, %p146
    %p149 = scmp.ne.s32.totalorder %s134, %s148
    %p150 = scmp.eq.s32.totalorder %s19, 0
    %p151 = por %p149, %p150
    %s153 = sadd.s32 %s152, 1
    %p156 = scmp.eq.s32.totalorder %s13, 1
    %p157 = scmp.ne.s32.totalorder %s152, %s154
    %p158 = scmp.eq.s32.totalorder %s13, 0
    %p159 = por %p157, %p158
    %p160 = scmp.ne.s32.totalorder %s152, %s154
    %p161 = scmp.eq.s32.totalorder %s18, 1
    %p162 = por %p160, %p161
    %p163 = scmp.ne.s32.totalorder %s154, %s155
    %p164 = scmp.eq.s32.totalorder %s18, 0
    %p165 = por %p163, %p164
    %p166 = scmp.ne.s32.totalorder %s154, %s155
    %p167 = scmp.eq.s32.totalorder %s19, 1
    %p168 = por %p166, %p167
    %p170 = scmp.ne.s32.totalorder %s155, %s169
    %p171 = scmp.eq.s32.totalorder %s19, 0
    %p172 = por %p170, %p171
    %s173 = ssub.s32 %s13, %s20
    %p174 = scmp.eq.s32.totalorder %s173, 0
    %s176 = sadd.s32 %s175, 1
    %s177 = scalar_select %p174, %s175, %s176
    %p180 = pneg %p174
    %p181 = scmp.eq.s32.totalorder %s13, 1
    %p182 = por %p180, %p181
    %p183 = scmp.ne.s32.totalorder %s175, %s178
    %p184 = scmp.eq.s32.totalorder %s13, 0
    %p185 = por %p183, %p184
    %p186 = scmp.ne.s32.totalorder %s175, %s178
    %p187 = scmp.eq.s32.totalorder %s18, 1
    %p188 = por %p186, %p187
    %p189 = scmp.ne.s32.totalorder %s178, %s179
    %p190 = scmp.eq.s32.totalorder %s18, 0
    %p191 = por %p189, %p190
    %p192 = scmp.ne.s32.totalorder %s178, %s179
    %p193 = scmp.eq.s32.totalorder %s19, 1
    %p194 = por %p192, %p193
    %p196 = scmp.ne.s32.totalorder %s179, %s195
    %p197 = scmp.eq.s32.totalorder %s19, 0
    %p198 = por %p196, %p197
    %p199 = scmp.le.s32.totalorder 1, %s13
    %p200 = scmp.lt.s32.totalorder %s13, 3
    %p201 = pnand %p199, %p200
    %p202 = pneg %p201
    // Predicated region
    $region9: #{sed_model_forward.1} parent=5 // pred_check
      _
    $region10: #{sed_model_forward.1} parent=5 // pred_check_branch
      %204 = sbr.rel (%p201) target = $region12
    $region11: #{sed_model_forward.1} parent=5 // pred_region
      %s205 = ssub.s32 %s13, 1
      // Predicated region
      $region13: #{sed_model_forward.1} parent=11 // pred_check
        %p206 = pneg %p60
      $region14: #{sed_model_forward.1} parent=11 // pred_check_branch
        %208 = sbr.rel (%p206) target = $region16
      $region15: #{sed_model_forward.1} parent=11 // pred_region
        _
      $region16: #{sed_model_forward.1} parent=11 // pred_fallthru
        _
      // Predicated region
      $region17: #{sed_model_forward.1} parent=11 // pred_check
        %p209 = pneg %p81
      $region18: #{sed_model_forward.1} parent=11 // pred_check_branch
        %211 = sbr.rel (%p209) target = $region20
      $region19: #{sed_model_forward.1} parent=11 // pred_region
        _
      $region20: #{sed_model_forward.1} parent=11 // pred_fallthru
        _
      // Predicated region
      $region21: #{sed_model_forward.1} parent=11 // pred_check
        %p212 = pneg %p102
      $region22: #{sed_model_forward.1} parent=11 // pred_check_branch
        %214 = sbr.rel (%p212) target = $region24
      $region23: #{sed_model_forward.1} parent=11 // pred_region
        _
      $region24: #{sed_model_forward.1} parent=11 // pred_fallthru
        _
      // Predicated region
      $region25: #{sed_model_forward.1} parent=11 // pred_check
        %p215 = pneg %p123
      $region26: #{sed_model_forward.1} parent=11 // pred_check_branch
        %217 = sbr.rel (%p215) target = $region28
      $region27: #{sed_model_forward.1} parent=11 // pred_region
        _
      $region28: #{sed_model_forward.1} parent=11 // pred_fallthru
        _
      // Predicated region
      $region29: #{sed_model_forward.1} parent=11 // pred_check
        %p218 = pneg %p144
      $region30: #{sed_model_forward.1} parent=11 // pred_check_branch
        %220 = sbr.rel (%p218) target = $region32
      $region31: #{sed_model_forward.1} parent=11 // pred_region
        _
      $region32: #{sed_model_forward.1} parent=11 // pred_fallthru
        _
      // Predicated region
      $region33: #{sed_model_forward.1} parent=11 // pred_check
        %p221 = pneg %p165
      $region34: #{sed_model_forward.1} parent=11 // pred_check_branch
        %223 = sbr.rel (%p221) target = $region36
      $region35: #{sed_model_forward.1} parent=11 // pred_region
        _
      $region36: #{sed_model_forward.1} parent=11 // pred_fallthru
        _
    $region12: #{sed_model_forward.1} parent=5 // pred_fallthru
      _
    %p224 = scmp.lt.s32.totalorder %s13, 2
    // Predicated region
    $region37: #{sed_model_forward.1} parent=5 // pred_check
      %p225 = pneg %p224
    $region38: #{sed_model_forward.1} parent=5 // pred_check_branch
      %227 = sbr.rel (%p225) target = $region40
    $region39: #{sed_model_forward.1} parent=5 // pred_region
      // Predicated region
      $region41: #{sed_model_forward.1} parent=39 // pred_check
        %p228 = pneg %p33
      $region42: #{sed_model_forward.1} parent=39 // pred_check_branch
        %230 = sbr.rel (%p228) target = $region44
      $region43: #{sed_model_forward.1} parent=39 // pred_region
        %s231 = smul.u32 2, %s13
        %p232 = scmp.lt.s32.totalorder %s231, 3
        %s233 = scalar_select %p232, %s231, 3
        %s234 = smul.addr %s233, 8
        %s235 = scalar_lea.vmem %s0, %s234
        %s236 = smul.u32 2, %s13
      $region44: #{sed_model_forward.1} parent=39 // pred_fallthru
        _
    $region40: #{sed_model_forward.1} parent=5 // pred_fallthru
      _
    %p237 = scmp.le.s32.totalorder 1, %s13
    %p238 = scmp.lt.s32.totalorder %s13, 3
    %p239 = pnand %p237, %p238
    %p240 = pneg %p239
    // Predicated region
    $region45: #{sed_model_forward.1} parent=5 // pred_check
      _
    $region46: #{sed_model_forward.1} parent=5 // pred_check_branch
      %242 = sbr.rel (%p239) target = $region48
    $region47: #{sed_model_forward.1} parent=5 // pred_region
      %s243 = ssub.s32 %s13, 1
      %s244 = smul.u32 2, %s18
      %p245 = scmp.lt.s32.totalorder %s244, 3
      %s246 = scalar_select %p245, %s244, 3
      %s247 = smul.addr %s246, 8
      %s248 = scalar_lea.vmem %s0, %s247
      %p249 = pneg %p39
      %p250 = pneg %p36
      %p251 = pneg %p60
      %p252 = pneg %p57
      %p253 = pneg %p81
      %p254 = pneg %p78
      %p255 = pneg %p102
      %p256 = pneg %p99
      %p257 = pneg %p123
      %p258 = pneg %p120
      %p259 = pneg %p144
      %p260 = pneg %p141
      %p261 = pneg %p165
      %p262 = pneg %p162
      %p263 = pneg %p191
      %p264 = pneg %p188
      %s265 = smul.u32 2, %s18
      %p266 = scmp.lt.s32.totalorder %s265, 3
      %s267 = scalar_select %p266, %s265, 3
      %s268 = smul.addr %s267, 8
      %s269 = scalar_lea.vmem %s7, %s268
      %s270 = smul.u32 2, %s18
      %p271 = scmp.lt.s32.totalorder %s270, 3
      %s272 = scalar_select %p271, %s270, 3
      %s273 = smul.addr %s272, 8
      %s274 = scalar_lea.vmem %s0, %s273
      %s275 = smul.u32 2, %s18
      %s276 = smul.u32 2, %s18
      %p277 = scmp.lt.s32.totalorder %s276, 3
      %s278 = scalar_select %p277, %s276, 3
      %s279 = smul.addr %s278, 8
      %s280 = scalar_lea.vmem %s7, %s279
      %s281 = smul.u32 2, %s18
      %v282 = vld [vmem:[%s274] sm:$0xff]
      %v283 = vld [vmem:[%s274 + $0x8] sm:$0xff]
      %v284 = vld [vmem:[%s1] sm:$0xff]
      %v285 = vld [vmem:[%s1 + $0x8] sm:$0xff]
      %v286 = vld [vmem:[%s1 + $0x10] sm:$0xff]
      %v287 = vld [vmem:[%s1 + $0x18] sm:$0xff]
      %v288 = vld [vmem:[%s1 + $0x20] sm:$0xff]
      %v289 = vld [vmem:[%s1 + $0x28] sm:$0xff]
      %v290 = vld [vmem:[%s1 + $0x30] sm:$0xff]
      %v291 = vld [vmem:[%s1 + $0x38] sm:$0xff]
      %v292 = vld [vmem:[%s2] sm:$0x1]
      %v294 = vlaneseq
      %v295 = vshrl.u32 %v294, 7
      %v296 = vsub.s32 0, %v295
      %v297 = vrot.slane %v292, %v296
      %vm299 = vcmask 523264
      %v301 = vsel %vm299, %v282, 0
      %v304 = vsel %vm299, %v283, 0
      %306 = vmatprep.subr.mxu0 0.0
      %307 = vmatpush1.msra.mxu0 %v284
      %308 = vmatprep.subr.mxu0 0.0
      %309 = vmatpush1.msra.mxu0 %v285
      %310 = vmatprep.subr.mxu0 0.0
      %311 = vmatpush1.msra.mxu0 %v286
      %312 = vmatprep.subr.mxu0 0.0
      %313 = vmatpush1.msra.mxu0 %v287
      %314 = vmatprep.subr.mxu0 0.0
      %315 = vmatpush1.msra.mxu0 %v288
      %316 = vmatprep.subr.mxu0 0.0
      %317 = vmatpush1.msra.mxu0 %v289
      %318 = vmatprep.subr.mxu0 0.0
      %319 = vmatpush1.msra.mxu0 %v290
      %320 = vmatprep.subr.mxu0 0.0
      %321 = vmatpush1.msra.mxu0 %v291
      %322 = vmatprep.subr.mxu0 0.0
      %323 = vmatpush1.msra.mxu0 0.0
      %324 = vmatprep.subr.mxu0 0.0
      %325 = vmatpush1.msra.mxu0 0.0
      %326 = vmatprep.subr.mxu0 0.0
      %327 = vmatpush1.msra.mxu0 0.0
      %328 = vmatprep.subr.mxu0 0.0
      %329 = vmatpush1.msra.mxu0 0.0
      %330 = vmatprep.subr.mxu0 0.0
      %331 = vmatpush1.msra.mxu0 0.0
      %332 = vmatprep.subr.mxu0 0.0
      %333 = vmatpush1.msra.mxu0 0.0
      %334 = vmatprep.subr.mxu0 0.0
      %335 = vmatpush1.msra.mxu0 0.0
      %336 = vmatprep.subr.mxu0 0.0
      %337 = vmatpush1.msra.mxu0 0.0
      %338 = vmatprep.subr.mxu0 0.0
      %339 = vmatpush1.msra.mxu0 0.0
      %340 = vmatprep.subr.mxu0 0.0
      %341 = vmatpush1.msra.mxu0 0.0
      %342 = vmatprep.subr.mxu0 0.0
      %343 = vmatpush1.msra.mxu0 0.0
      %344 = vmatprep.subr.mxu0 0.0
      %345 = vmatpush1.msra.mxu0 0.0
      %346 = vmatprep.subr.mxu0 0.0
      %347 = vmatpush1.msra.mxu0 0.0
      %348 = vmatprep.subr.mxu0 0.0
      %349 = vmatpush1.msra.mxu0 0.0
      %350 = vmatprep.subr.mxu0 0.0
      %351 = vmatpush1.msra.mxu0 0.0
      %352 = vmatprep.subr.mxu0 0.0
      %353 = vmatpush1.msra.mxu0 0.0
      %354 = vmatprep.subr.mxu0 0.0
      %355 = vmatpush1.msra.mxu0 0.0
      %356 = vmatprep.subr.mxu0 0.0
      %357 = vmatpush1.msra.mxu0 0.0
      %358 = vmatprep.subr.mxu0 0.0
      %359 = vmatpush1.msra.mxu0 0.0
      %360 = vmatprep.subr.mxu0 0.0
      %361 = vmatpush1.msra.mxu0 0.0
      %362 = vmatprep.subr.mxu0 0.0
      %363 = vmatpush1.msra.mxu0 0.0
      %364 = vmatprep.subr.mxu0 0.0
      %365 = vmatpush1.msra.mxu0 0.0
      %366 = vmatprep.subr.mxu0 0.0
      %367 = vmatpush1.msra.mxu0 0.0
      %368 = vmatprep.subr.mxu0 0.0
      %369 = vmatpush1.msra.mxu0 0.0
      %370 = vmatprep.mubr.f32.mxu0 0.0
      %371 = vmatmul.mubr.f32.gmra.mrb[0].mxu0 %v301
      %v372 = vpop.f32.mrb[0].mxu0
      %v373 = vadd.f32 %v297, %v372
      %v374 = vpop.f32.mrb[0].mxu0
      %375 = vmatprep.mubr.f32.mxu0 0.0
      %376 = vmatmul.mubr.f32.gmra.mrb[0].mxu0 %v304
      %v377 = vpop.f32.mrb[0].mxu0
      %v378 = vadd.f32 %v297, %v377
      %v379 = vpop.f32.mrb[0].mxu0
      %380 = vdwg.mxu0
      %v381 = vmax.f32 %v373, 0.0
      %v382 = vmax.f32 %v378, 0.0
      %v383 = vld [vmem:[%s3] sm:$0xff]
      %v384 = vld [vmem:[%s3 + $0x8] sm:$0xff]
      %v385 = vld [vmem:[%s3 + $0x10] sm:$0xff]
      %v386 = vld [vmem:[%s3 + $0x18] sm:$0xff]
      %v387 = vld [vmem:[%s4] sm:$0x1]
      %v389 = vlaneseq
      %v390 = vshrl.u32 %v389, 7
      %v391 = vsub.s32 0, %v390
      %v392 = vrot.slane %v387, %v391
      %vm394 = vcmask 261120
      %v396 = vsel %vm394, %v381, 0
      %v399 = vsel %vm394, %v382, 0
      %401 = vmatprep.subr.mxu0 0.0
      %402 = vmatpush1.msra.mxu0 %v383
      %403 = vmatprep.subr.mxu0 0.0
      %404 = vmatpush1.msra.mxu0 %v384
      %405 = vmatprep.subr.mxu0 0.0
      %406 = vmatpush1.msra.mxu0 %v385
      %407 = vmatprep.subr.mxu0 0.0
      %408 = vmatpush1.msra.mxu0 %v386
      %409 = vmatprep.subr.mxu0 0.0
      %410 = vmatpush1.msra.mxu0 0.0
      %411 = vmatprep.subr.mxu0 0.0
      %412 = vmatpush1.msra.mxu0 0.0
      %413 = vmatprep.subr.mxu0 0.0
      %414 = vmatpush1.msra.mxu0 0.0
      %415 = vmatprep.subr.mxu0 0.0
      %416 = vmatpush1.msra.mxu0 0.0
      %417 = vmatprep.subr.mxu0 0.0
      %418 = vmatpush1.msra.mxu0 0.0
      %419 = vmatprep.subr.mxu0 0.0
      %420 = vmatpush1.msra.mxu0 0.0
      %421 = vmatprep.subr.mxu0 0.0
      %422 = vmatpush1.msra.mxu0 0.0
      %423 = vmatprep.subr.mxu0 0.0
      %424 = vmatpush1.msra.mxu0 0.0
      %425 = vmatprep.subr.mxu0 0.0
      %426 = vmatpush1.msra.mxu0 0.0
      %427 = vmatprep.subr.mxu0 0.0
      %428 = vmatpush1.msra.mxu0 0.0
      %429 = vmatprep.subr.mxu0 0.0
      %430 = vmatpush1.msra.mxu0 0.0
      %431 = vmatprep.subr.mxu0 0.0
      %432 = vmatpush1.msra.mxu0 0.0
      %433 = vmatprep.subr.mxu0 0.0
      %434 = vmatpush1.msra.mxu0 0.0
      %435 = vmatprep.subr.mxu0 0.0
      %436 = vmatpush1.msra.mxu0 0.0
      %437 = vmatprep.subr.mxu0 0.0
      %438 = vmatpush1.msra.mxu0 0.0
      %439 = vmatprep.subr.mxu0 0.0
      %440 = vmatpush1.msra.mxu0 0.0
      %441 = vmatprep.subr.mxu0 0.0
      %442 = vmatpush1.msra.mxu0 0.0
      %443 = vmatprep.subr.mxu0 0.0
      %444 = vmatpush1.msra.mxu0 0.0
      %445 = vmatprep.subr.mxu0 0.0
      %446 = vmatpush1.msra.mxu0 0.0
      %447 = vmatprep.subr.mxu0 0.0
      %448 = vmatpush1.msra.mxu0 0.0
      %449 = vmatprep.subr.mxu0 0.0
      %450 = vmatpush1.msra.mxu0 0.0
      %451 = vmatprep.subr.mxu0 0.0
      %452 = vmatpush1.msra.mxu0 0.0
      %453 = vmatprep.subr.mxu0 0.0
      %454 = vmatpush1.msra.mxu0 0.0
      %455 = vmatprep.subr.mxu0 0.0
      %456 = vmatpush1.msra.mxu0 0.0
      %457 = vmatprep.subr.mxu0 0.0
      %458 = vmatpush1.msra.mxu0 0.0
      %459 = vmatprep.subr.mxu0 0.0
      %460 = vmatpush1.msra.mxu0 0.0
      %461 = vmatprep.subr.mxu0 0.0
      %462 = vmatpush1.msra.mxu0 0.0
      %463 = vmatprep.subr.mxu0 0.0
      %464 = vmatpush1.msra.mxu0 0.0
      %465 = vmatprep.mubr.f32.mxu0 0.0
      %466 = vmatmul.mubr.f32.gmra.mrb[0].mxu0 %v396
      %v467 = vpop.f32.mrb[0].mxu0
      %v468 = vadd.f32 %v392, %v467
      %v469 = vpop.f32.mrb[0].mxu0
      %470 = vmatprep.mubr.f32.mxu0 0.0
      %471 = vmatmul.mubr.f32.gmra.mrb[0].mxu0 %v399
      %v472 = vpop.f32.mrb[0].mxu0
      %v473 = vadd.f32 %v392, %v472
      %v474 = vpop.f32.mrb[0].mxu0
      %475 = vdwg.mxu0
      %v476 = vmax.f32 %v468, 0.0
      %v477 = vmax.f32 %v473, 0.0
      %v478 = vld [vmem:[%s5] sm:$0xff]
      %v479 = vld [vmem:[%s5 + $0x8] sm:$0xff]
      %v480 = vld [vmem:[%s5 + $0x10] sm:$0xff]
      %v481 = vld [vmem:[%s5 + $0x18] sm:$0xff]
      %v482 = vld [vmem:[%s6] sm:$0x1]
      %v484 = vlaneseq
      %v485 = vshrl.u32 %v484, 7
      %v486 = vsub.s32 0, %v485
      %v487 = vrot.slane %v482, %v486
      %v490 = vsel %vm394, %v476, 0
      %v493 = vsel %vm394, %v477, 0
      %495 = vmatprep.subr.mxu0 0.0
      %496 = vmatpush1.msra.mxu0 %v478
      %497 = vmatprep.subr.mxu0 0.0
      %498 = vmatpush1.msra.mxu0 %v479
      %499 = vmatprep.subr.mxu0 0.0
      %500 = vmatpush1.msra.mxu0 %v480
      %501 = vmatprep.subr.mxu0 0.0
      %502 = vmatpush1.msra.mxu0 %v481
      %503 = vmatprep.subr.mxu0 0.0
      %504 = vmatpush1.msra.mxu0 0.0
      %505 = vmatprep.subr.mxu0 0.0
      %506 = vmatpush1.msra.mxu0 0.0
      %507 = vmatprep.subr.mxu0 0.0
      %508 = vmatpush1.msra.mxu0 0.0
      %509 = vmatprep.subr.mxu0 0.0
      %510 = vmatpush1.msra.mxu0 0.0
      %511 = vmatprep.subr.mxu0 0.0
      %512 = vmatpush1.msra.mxu0 0.0
      %513 = vmatprep.subr.mxu0 0.0
      %514 = vmatpush1.msra.mxu0 0.0
      %515 = vmatprep.subr.mxu0 0.0
      %516 = vmatpush1.msra.mxu0 0.0
      %517 = vmatprep.subr.mxu0 0.0
      %518 = vmatpush1.msra.mxu0 0.0
      %519 = vmatprep.subr.mxu0 0.0
      %520 = vmatpush1.msra.mxu0 0.0
      %521 = vmatprep.subr.mxu0 0.0
      %522 = vmatpush1.msra.mxu0 0.0
      %523 = vmatprep.subr.mxu0 0.0
      %524 = vmatpush1.msra.mxu0 0.0
      %525 = vmatprep.subr.mxu0 0.0
      %526 = vmatpush1.msra.mxu0 0.0
      %527 = vmatprep.subr.mxu0 0.0
      %528 = vmatpush1.msra.mxu0 0.0
      %529 = vmatprep.subr.mxu0 0.0
      %530 = vmatpush1.msra.mxu0 0.0
      %531 = vmatprep.subr.mxu0 0.0
      %532 = vmatpush1.msra.mxu0 0.0
      %533 = vmatprep.subr.mxu0 0.0
      %534 = vmatpush1.msra.mxu0 0.0
      %535 = vmatprep.subr.mxu0 0.0
      %536 = vmatpush1.msra.mxu0 0.0
      %537 = vmatprep.subr.mxu0 0.0
      %538 = vmatpush1.msra.mxu0 0.0
      %539 = vmatprep.subr.mxu0 0.0
      %540 = vmatpush1.msra.mxu0 0.0
      %541 = vmatprep.subr.mxu0 0.0
      %542 = vmatpush1.msra.mxu0 0.0
      %543 = vmatprep.subr.mxu0 0.0
      %544 = vmatpush1.msra.mxu0 0.0
      %545 = vmatprep.subr.mxu0 0.0
      %546 = vmatpush1.msra.mxu0 0.0
      %547 = vmatprep.subr.mxu0 0.0
      %548 = vmatpush1.msra.mxu0 0.0
      %549 = vmatprep.subr.mxu0 0.0
      %550 = vmatpush1.msra.mxu0 0.0
      %551 = vmatprep.subr.mxu0 0.0
      %552 = vmatpush1.msra.mxu0 0.0
      %553 = vmatprep.subr.mxu0 0.0
      %554 = vmatpush1.msra.mxu0 0.0
      %555 = vmatprep.subr.mxu0 0.0
      %556 = vmatpush1.msra.mxu0 0.0
      %557 = vmatprep.subr.mxu0 0.0
      %558 = vmatpush1.msra.mxu0 0.0
      %559 = vmatprep.mubr.f32.mxu0 0.0
      %560 = vmatmul.mubr.f32.gmra.mrb[0].mxu0 %v490
      %v561 = vpop.f32.mrb[0].mxu0
      %v562 = vadd.f32 %v487, %v561
      %v563 = vpop.f32.mrb[0].mxu0
      %564 = vmatprep.mubr.f32.mxu0 0.0
      %565 = vmatmul.mubr.f32.gmra.mrb[0].mxu0 %v493
      %v566 = vpop.f32.mrb[0].mxu0
      %v567 = vadd.f32 %v487, %v566
      %v568 = vpop.f32.mrb[0].mxu0
      %569 = vdwg.mxu0
      %v570 = vsub.f32 0.0, %v562
      %v571 = vsub.f32 0.0, %v567
      %v572 = vmul.f32 %v570, 1.442695
      %v573 = vpow.pop %v572
      %v574 = vmul.f32 %v571, 1.442695
      %v575 = vpow.pop %v574
      %v576 = vadd.f32 %v573, 1.0
      %v577 = vadd.f32 %v575, 1.0
      %v578 = vrcp.pop %v576
      %v579 = vrcp.pop %v577
      %vm580 = vcmask 80896
      %581 = vst.msk [vmem:[%s280] sm:$0xff] %vm580, %v578
      %582 = vst.msk [vmem:[%s280 + $0x8] sm:$0xff] %vm580, %v579
      %s583 = smul.u32 2, %s18
      %p584 = scmp.lt.s32.totalorder %s583, 3
      %s585 = scalar_select %p584, %s583, 3
      %s586 = smul.addr %s585, 8
      %s587 = scalar_lea.vmem %s7, %s586
      // Predicated region
      $region49: #{sed_model_forward.1} parent=47 // pred_check
        %p588 = pneg %p188
      $region50: #{sed_model_forward.1} parent=47 // pred_check_branch
        %590 = sbr.rel (%p588) target = $region52
      $region51: #{sed_model_forward.1} parent=47 // pred_region
        %s591 = smul.u32 2, %s18
      $region52: #{sed_model_forward.1} parent=47 // pred_fallthru
        _
    $region48: #{sed_model_forward.1} parent=5 // pred_fallthru
      _
    %p592 = scmp.le.s32.totalorder 2, %s13
    // Predicated region
    $region53: #{sed_model_forward.1} parent=5 // pred_check
      %p593 = pneg %p592
    $region54: #{sed_model_forward.1} parent=5 // pred_check_branch
      %595 = sbr.rel (%p593) target = $region56
    $region55: #{sed_model_forward.1} parent=5 // pred_region
      %s596 = ssub.s32 %s13, 2
      // Predicated region
      $region57: #{sed_model_forward.1} parent=55 // pred_check
        %p597 = pneg %p194
      $region58: #{sed_model_forward.1} parent=55 // pred_check_branch
        %599 = sbr.rel (%p597) target = $region60
      $region59: #{sed_model_forward.1} parent=55 // pred_region
        %s600 = smul.u32 2, %s19
        %p601 = scmp.lt.s32.totalorder %s600, 3
        %s602 = scalar_select %p601, %s600, 3
        %s603 = smul.addr %s602, 8
        %s604 = scalar_lea.vmem %s7, %s603
      $region60: #{sed_model_forward.1} parent=55 // pred_fallthru
        _
    $region56: #{sed_model_forward.1} parent=5 // pred_fallthru
      _
  $region6: #{sed_model_forward.1} parent=0 // loop_footer
    %s17 = sadd.s32 1, %s13
  $region7: #{sed_model_forward.1} parent=0 // loop_footer_branch
    %12 = sbr.rel target = $region3
  $region8: #{sed_model_forward.1} parent=0 // loop_exit
    _

</llo_original>
